<compile_context>
chip_gen: v6e
topology: v6e:2x2x1
jax: 0.10.0
libtpu: 0.0.40
codegen_flags: <defaults>
</compile_context>

<pallas_src>
import jax
import jax.numpy as jnp
from jax.experimental import pallas as pl
from jax.experimental.pallas import tpu as pltpu


LANES = 128                 # lane width of a vreg; last dim of every block
_DEFAULT_TILE_ROWS = 4096   # 4096 x 128 f32 = 2 MiB x-tile (+2 MiB out-tile)


def _round_up(v, m):
    return ((v + m - 1) // m) * m


def linear2x2_kernel(x_ref, wa_ref, wb_ref, bb_ref, o_ref):
    """One batch tile of nn.Linear(2, 2), computed in interleaved layout.

    x_ref / o_ref : (TILE_ROWS, 128) f32 VMEM.  Row-major flattening of the
                    (batch, feature) array: even lanes = feature 0, odd lanes
                    = feature 1 of consecutive batch elements.
    wa_ref/wb_ref/bb_ref : (1, 128) f32 VMEM lane-pattern rows:
        wa = [w00, w11, w00, w11, ...]  (weight for the lane's own feature)
        wb = [w01, w10, w01, w10, ...]  (weight for the partner feature)
        bb = [b0,  b1,  b0,  b1,  ...]
    """
    x = x_ref[...]
    lanes = x.shape[-1]
    lane_idx = jax.lax.broadcasted_iota(jnp.int32, x.shape, dimension=1)
    is_even = (lane_idx & 1) == 0
    # Partner feature of every lane: even lane 2j pairs with 2j+1, odd lane
    # 2j+1 pairs with 2j.  Two XLU rotates + one VPU select; the wrap-around
    # lanes are masked off by the select, so there is no edge effect.
    partner = jnp.where(
        is_even,
        pltpu.roll(x, shift=lanes - 1, axis=1),  # == roll by -1
        pltpu.roll(x, shift=1, axis=1),
    )
    o_ref[...] = (x * wa_ref[...] + partner * wb_ref[...] + bb_ref[...]).astype(
        o_ref.dtype
    )


def simple_net_forward(
    x,
    w,
    b,
    *,
    tile_rows=_DEFAULT_TILE_ROWS,
    force_pallas=False,
    small_batch_threshold=32768,
):
    """Forward pass of SimpleNet (nn.Linear(2, 2)): returns x @ w.T + b.

    x: (N, 2) f32, w: (2, 2) f32 (PyTorch layout), b: (2,) f32.
    """
    n, in_features = x.shape
    out_features = w.shape[0]
    if in_features != 2 or out_features != 2:
        raise ValueError("this kernel is specialized to nn.Linear(2, 2)")

    xf = x.astype(jnp.float32)
    wf = w.astype(jnp.float32)
    bf = b.astype(jnp.float32)

    # Small-N fast path: at tiny batch the pad + launch overhead dwarfs the
    # ~8*N FLOPs, so plain XLA is strictly faster.
    if not force_pallas and n < small_batch_threshold:
        return xf @ wf.T + bf

    # ---- Layout: flatten (N, 2) row-major into a lane+sublane dense slab ----
    elems_per_row = LANES // in_features        # 64 batch elements per row
    rows_needed = pl.cdiv(n, elems_per_row)

    # Tile selection: rows are the second-to-last block dim -> multiple of 8.
    tile_rows = max(8, (int(tile_rows) // 8) * 8)
    n_tiles = pl.cdiv(rows_needed, tile_rows)
    # Use >=2 tiles at moderate N so ("parallel",) can shard across the two
    # TensorCores on v7x (no-op cost on single-TC v5e/v6e).
    if n_tiles == 1 and rows_needed >= 2048:
        n_tiles = 2
    # Equalize tiles across the grid; bounds padding waste to < 8 rows/tile.
    tile_rows = _round_up(pl.cdiv(rows_needed, n_tiles), 8)
    rows_padded = n_tiles * tile_rows
    n_pad = rows_padded * elems_per_row

    x_flat = jnp.pad(xf, ((0, n_pad - n), (0, 0))).reshape(rows_padded, LANES)

    # Lane-pattern rows for the interleaved compute (tiny, grid-resident).
    even = (jnp.arange(LANES) % 2) == 0
    wa = jnp.where(even, wf[0, 0], wf[1, 1]).reshape(1, LANES)
    wb = jnp.where(even, wf[0, 1], wf[1, 0]).reshape(1, LANES)
    bb = jnp.where(even, bf[0], bf[1]).reshape(1, LANES)

    out_flat = pl.pallas_call(
        linear2x2_kernel,
        out_shape=jax.ShapeDtypeStruct((rows_padded, LANES), jnp.float32),
        grid_spec=pltpu.PrefetchScalarGridSpec(
            num_scalar_prefetch=0,
            grid=(n_tiles,),
            in_specs=[
                pl.BlockSpec((tile_rows, LANES), lambda i: (i, 0)),
                pl.BlockSpec((1, LANES), lambda i: (0, 0)),
                pl.BlockSpec((1, LANES), lambda i: (0, 0)),
                pl.BlockSpec((1, LANES), lambda i: (0, 0)),
            ],
            out_specs=pl.BlockSpec((tile_rows, LANES), lambda i: (i, 0)),
        ),
        compiler_params=pltpu.CompilerParams(
            # Independent batch tiles -> megacore sharding on v7x.
            dimension_semantics=("parallel",),
        ),
    )(x_flat, wa, wb, bb)

    # Contiguous reshape back to (N, 2); padding rows sliced off.  No transpose.
    return out_flat.reshape(n_pad, in_features)[:n]


def init_params(key, in_features=2, out_features=2):
    # Deterministic init mimicking PyTorch nn.Linear default:
    # U(-1/sqrt(in_features), 1/sqrt(in_features)) for weight and bias.
    kw, kb = jax.random.split(key)
    bound = 1.0 / jnp.sqrt(jnp.float32(in_features))
    w = jax.random.uniform(
        kw, (out_features, in_features), jnp.float32, -bound, bound
    )
    b = jax.random.uniform(kb, (out_features,), jnp.float32, -bound, bound)
    return w, b


if __name__ == "__main__":
    key = jax.random.PRNGKey(0)
    k_x, k_p = jax.random.split(key)

    # Input consistent with the module's usage: x = torch.randn(100, 2)
    x = jax.random.normal(k_x, (100, 2), dtype=jnp.float32)
    w, b = init_params(k_p)
    ref = x @ w.T + b

    # Force the Pallas path (the auto heuristic would take the XLA fast path
    # at N=100), single-tile grid.
    out = simple_net_forward(x, w, b, force_pallas=True)
    out = jax.block_until_ready(out)
    assert out.shape == (100, 2)
    assert jnp.allclose(out, ref, atol=1e-5, rtol=1e-5)

    # Also exercise the multi-tile grid path (grid > 1) with a tiny tile.
    x2 = jax.random.normal(k_x, (1000, 2), dtype=jnp.float32)
    out2 = jax.block_until_ready(
        simple_net_forward(x2, w, b, tile_rows=8, force_pallas=True)
    )
    assert out2.shape == (1000, 2)
    assert jnp.allclose(out2, x2 @ w.T + b, atol=1e-5, rtol=1e-5)

    print("KERNEL_OK")
</pallas_src>

<mosaic_0001>
module attributes {stable_mosaic.version = 11 : i64} {
  func.func @linear2x2_kernel(%arg0: i32, %arg1: memref<8x128xf32, #tpu.memory_space<vmem>>, %arg2: memref<1x128xf32, #tpu.memory_space<vmem>>, %arg3: memref<1x128xf32, #tpu.memory_space<vmem>>, %arg4: memref<1x128xf32, #tpu.memory_space<vmem>>, %arg5: memref<8x128xf32, #tpu.memory_space<vmem>>) attributes {dimension_semantics = [#tpu.dimension_semantics<parallel>], iteration_bounds = array<i64: 1>, scalar_prefetch = 0 : i64, scratch_operands = 0 : i64, tpu.core_type = #tpu.core_type<tc>, window_params = [{transform_indices = @transform_0, window_bounds = array<i64: 8, 128>}, {pipeline_mode = #tpu.pipeline_mode<synchronous>, transform_indices = @transform_1, window_bounds = array<i64: 1, 128>}, {pipeline_mode = #tpu.pipeline_mode<synchronous>, transform_indices = @transform_2, window_bounds = array<i64: 1, 128>}, {pipeline_mode = #tpu.pipeline_mode<synchronous>, transform_indices = @transform_3, window_bounds = array<i64: 1, 128>}, {transform_indices = @transform_4, window_bounds = array<i64: 8, 128>}]} {
    %c0 = arith.constant 0 : index
    %c0_0 = arith.constant 0 : index
    %0 = vector.load %arg1[%c0, %c0_0] : memref<8x128xf32, #tpu.memory_space<vmem>>, vector<8x128xf32>
    %1 = tpu.iota {dimensions = array<i32: 1>} : vector<8x128xi32>
    %c1_i32 = arith.constant 1 : i32
    %2 = vector.broadcast %c1_i32 : i32 to vector<8x128xi32>
    %3 = arith.andi %1, %2 : vector<8x128xi32>
    %c0_i32 = arith.constant 0 : i32
    %4 = vector.broadcast %c0_i32 : i32 to vector<8x128xi32>
    %5 = arith.cmpi eq, %3, %4 : vector<8x128xi32>
    %c127_i32 = arith.constant 127 : i32
    %6 = tpu.dynamic_rotate %0 by %c127_i32 dim 1 : vector<8x128xf32>, i32 -> vector<8x128xf32>
    %c1_i32_1 = arith.constant 1 : i32
    %7 = tpu.dynamic_rotate %0 by %c1_i32_1 dim 1 : vector<8x128xf32>, i32 -> vector<8x128xf32>
    %8 = arith.select %5, %6, %7 : vector<8x128xi1>, vector<8x128xf32>
    %c0_2 = arith.constant 0 : index
    %c0_3 = arith.constant 0 : index
    %9 = vector.load %arg2[%c0_2, %c0_3] : memref<1x128xf32, #tpu.memory_space<vmem>>, vector<1x128xf32>
    %10 = vector.broadcast %9 : vector<1x128xf32> to vector<8x128xf32>
    %11 = arith.mulf %0, %10 : vector<8x128xf32>
    %c0_4 = arith.constant 0 : index
    %c0_5 = arith.constant 0 : index
    %12 = vector.load %arg3[%c0_4, %c0_5] : memref<1x128xf32, #tpu.memory_space<vmem>>, vector<1x128xf32>
    %13 = vector.broadcast %12 : vector<1x128xf32> to vector<8x128xf32>
    %14 = arith.mulf %8, %13 : vector<8x128xf32>
    %15 = arith.addf %11, %14 : vector<8x128xf32>
    %c0_6 = arith.constant 0 : index
    %c0_7 = arith.constant 0 : index
    %16 = vector.load %arg4[%c0_6, %c0_7] : memref<1x128xf32, #tpu.memory_space<vmem>>, vector<1x128xf32>
    %17 = vector.broadcast %16 : vector<1x128xf32> to vector<8x128xf32>
    %18 = arith.addf %15, %17 : vector<8x128xf32>
    %c0_8 = arith.constant 0 : index
    %c0_9 = arith.constant 0 : index
    %19 = vector.load %arg5[%c0_8, %c0_9] : memref<8x128xf32, #tpu.memory_space<vmem>>, vector<8x128xf32>
    tpu.vector_store %arg5[%c0_8, %c0_9], %18 {strides = array<i32>} : memref<8x128xf32, #tpu.memory_space<vmem>>, vector<8x128xf32>,
    return
  }
  func.func @transform_0(%arg0: i32) -> (i32, i32) {
    %c0_i32 = arith.constant 0 : i32
    %c0_i32_0 = arith.constant 0 : i32
    return %arg0, %c0_i32 : i32, i32
  }
  func.func @transform_1(%arg0: i32) -> (i32, i32) {
    %c0_i32 = arith.constant 0 : i32
    %c0_i32_0 = arith.constant 0 : i32
    %c0_i32_1 = arith.constant 0 : i32
    return %c0_i32, %c0_i32_0 : i32, i32
  }
  func.func @transform_2(%arg0: i32) -> (i32, i32) {
    %c0_i32 = arith.constant 0 : i32
    %c0_i32_0 = arith.constant 0 : i32
    %c0_i32_1 = arith.constant 0 : i32
    return %c0_i32, %c0_i32_0 : i32, i32
  }
  func.func @transform_3(%arg0: i32) -> (i32, i32) {
    %c0_i32 = arith.constant 0 : i32
    %c0_i32_0 = arith.constant 0 : i32
    %c0_i32_1 = arith.constant 0 : i32
    return %c0_i32, %c0_i32_0 : i32, i32
  }
  func.func @transform_4(%arg0: i32) -> (i32, i32) {
    %c0_i32 = arith.constant 0 : i32
    %c0_i32_0 = arith.constant 0 : i32
    return %arg0, %c0_i32 : i32, i32
  }
}

</mosaic_0001>

<llo_original>
// kernel: tpu_custom_call.1
$region0: #{tpu_custom_call.1}
  #allocation0 [shape = 'u32[]', space=smem, size = 0x4, offset = 0x4, fixed_abs, tag = 'smem constant byte address 0x4 - core index']
  #allocation1 [shape = 'u32[144,128]{1,0:T(1,128)}', space=vmem, size = 0x12000, scoped, tag = 'internal scratch']
  %s0 = inlined_call_operand.hbm [shape: f32[8,128], index: 0, kind: input, shape index: {}]
  %s1 = inlined_call_operand.vmem [shape: f32[1,128], index: 1, kind: input, shape index: {}]
  %s2 = inlined_call_operand.vmem [shape: f32[1,128], index: 2, kind: input, shape index: {}]
  %s3 = inlined_call_operand.vmem [shape: f32[1,128], index: 3, kind: input, shape index: {}]
  %s4 = inlined_call_operand.hbm [shape: f32[8,128], index: 4, kind: output, shape index: {}]
  %s5 = sld [smem:[#allocation0]]
  $region30: #{tpu_custom_call.1} parent=0
    _
  %s7 = ssub.s32 1, %s5
  %s8 = scalar_select 0, %s7, %s5
  $region1: #{tpu_custom_call.1} parent=0
    #allocation2 [shape = 'u8[4096]{0}', space=vmem, size = 0x1000, scoped, tag = 'input window, operand 0, single buffered']
    #allocation3 [shape = 's32[1]{0}', space=sflag, size = 0x4, scoped, tag = 'scoped memory for tpu_custom_call.1']
    #allocation4 [shape = 's32[1]{0}', space=sflag, size = 0x4, scoped, tag = 'scoped memory for tpu_custom_call.1']
    #allocation5 [shape = 'u8[4096]{0}', space=vmem, size = 0x1000, scoped, tag = 'output window, operand 0, single buffered']
    %9 = vsyncpa [#allocation3], 0
    %10 = vsyncpa [#allocation4], 0
    // Predicated region
    $region2: #{tpu_custom_call.1} parent=1 // pred_check
      _
    $region3: #{tpu_custom_call.1} parent=1 // pred_check_branch
      %12 = sbr.rel (0) target = $region5
    $region4: #{tpu_custom_call.1} parent=1 // pred_region
      %s14 = ssub.s32 128, 128
      %15 = vsyncadd [#allocation3], %s14
      %s17 = sshll.u32 [#allocation2], 4
      %s18 = int_to_ptr.vmem [resolvable:$true] %s17
      %20 = dma.hbm_to_vmem [thread:$0]  %s0, 128, %s18, [#allocation3]
    $region5: #{tpu_custom_call.1} parent=1 // pred_fallthru
      _
    // Predicated region
    $region6: #{tpu_custom_call.1} parent=1 // pred_check
      _
    $region7: #{tpu_custom_call.1} parent=1 // pred_check_branch
      %22 = sbr.rel (0) target = $region9
    $region8: #{tpu_custom_call.1} parent=1 // pred_region
      _
    $region9: #{tpu_custom_call.1} parent=1 // pred_fallthru
      _
    // Predicated region
    $region10: #{tpu_custom_call.1} parent=1 // pred_check
      _
    $region11: #{tpu_custom_call.1} parent=1 // pred_check_branch
      %24 = sbr.rel (0) target = $region13
    $region12: #{tpu_custom_call.1} parent=1 // pred_region
      _
    $region13: #{tpu_custom_call.1} parent=1 // pred_fallthru
      _
    // Predicated region
    $region14: #{tpu_custom_call.1} parent=1 // pred_check
      _
    $region15: #{tpu_custom_call.1} parent=1 // pred_check_branch
      %26 = sbr.rel (0) target = $region17
    $region16: #{tpu_custom_call.1} parent=1 // pred_region
      _
    $region17: #{tpu_custom_call.1} parent=1 // pred_fallthru
      _
    // Predicated region
    $region18: #{tpu_custom_call.1} parent=1 // pred_check
      _
    $region19: #{tpu_custom_call.1} parent=1 // pred_check_branch
      %28 = sbr.rel (0) target = $region21
    $region20: #{tpu_custom_call.1} parent=1 // pred_region
      %29 = dma.done [#allocation3], 128
    $region21: #{tpu_custom_call.1} parent=1 // pred_fallthru
      _
    %v30 = vld [vmem:[#allocation2] sm:$0xff]
    %v31 = vlaneseq
    %v32 = vand.u32 %v31, 127
    %v33 = vand.u32 %v32, 1
    %vm34 = vcmp.eq.s32.totalorder %v33, 0
    %35 = vrot.lane.b32.xlu0 %v30, 127
    %v36 = vpop.permute.xlu0 %35
    %37 = vrot.lane.b32.xlu0 %v30, 1
    %v38 = vpop.permute.xlu0 %37
    %v39 = vsel %vm34, %v36, %v38
    %v40 = vld [vmem:[%s1] sm:$0x1]
    %v42 = vlaneseq
    %v43 = vshrl.u32 %v42, 7
    %v44 = vsub.s32 0, %v43
    %v45 = vrot.slane %v40, %v44
    %v47 = vmul.f32 %v30, %v45
    %v48 = vld [vmem:[%s2] sm:$0x1]
    %v50 = vlaneseq
    %v51 = vshrl.u32 %v50, 7
    %v52 = vsub.s32 0, %v51
    %v53 = vrot.slane %v48, %v52
    %v55 = vmul.f32 %v39, %v53
    %v56 = vadd.f32 %v47, %v55
    %v57 = vld [vmem:[%s3] sm:$0x1]
    %v59 = vlaneseq
    %v60 = vshrl.u32 %v59, 7
    %v61 = vsub.s32 0, %v60
    %v62 = vrot.slane %v57, %v61
    %v64 = vadd.f32 %v56, %v62
    %65 = vst [vmem:[#allocation5] sm:$0xff] %v64
    // Predicated region
    $region22: #{tpu_custom_call.1} parent=1 // pred_check
      _
    $region23: #{tpu_custom_call.1} parent=1 // pred_check_branch
      %67 = sbr.rel (0) target = $region25
    $region24: #{tpu_custom_call.1} parent=1 // pred_region
      %s69 = ssub.s32 128, 128
      %70 = vsyncadd [#allocation4], %s69
      %s72 = sshll.u32 [#allocation5], 4
      %s73 = int_to_ptr.vmem [resolvable:$true] %s72
      %75 = dma.vmem_to_hbm [thread:$0]  %s73, 128, %s4, [#allocation4]
    $region25: #{tpu_custom_call.1} parent=1 // pred_fallthru
      _
    // Predicated region
    $region26: #{tpu_custom_call.1} parent=1 // pred_check
      _
    $region27: #{tpu_custom_call.1} parent=1 // pred_check_branch
      %77 = sbr.rel (0) target = $region29
    $region28: #{tpu_custom_call.1} parent=1 // pred_region
      %78 = dma.done [#allocation4], 128
    $region29: #{tpu_custom_call.1} parent=1 // pred_fallthru
      _
    %79 = vsyncpa [#allocation3], 1
    %80 = vsyncpa [#allocation4], 1

</llo_original>
